<compile_context>
chip_gen: v5e
topology: v5e:2x2
jax: 0.10.0
libtpu: 0.0.40
codegen_flags: <defaults>
</compile_context>

<pallas_src>
import functools

import jax
import jax.numpy as jnp
from jax.experimental import pallas as pl
from jax.experimental.pallas import tpu as pltpu


# dot_general dims for "U^T @ rhs": contract axis 0 of U with axis 0 of rhs
# (the transpose is absorbed into the MXU operand feed; no XLU transpose).
_DN_T = (((0,), (0,)), ((), ()))


def _round_up(x, m):
    return ((x + m - 1) // m) * m


def _pow_const(x, p):
    """x ** p for a trace-time constant p. Small integer p -> VPU multiplies."""
    p = float(p)
    if p == 0.0:
        return jnp.ones_like(x)
    if p == int(p) and 0 < int(p) <= 64:
        n = int(p)
        acc = None
        base = x
        while n:
            if n & 1:
                acc = base if acc is None else acc * base
            n >>= 1
            if n:
                base = base * base
        return acc
    return jnp.power(x, p)


def _vmem_budget_bytes():
    """Generation-aware scoped-VMEM budget (v7x has only 64 MiB per TC)."""
    phys = 64 * 1024 * 1024  # conservative fallback = v7x physical
    try:
        info = pltpu.get_tpu_info()
        phys = int(getattr(info, "vmem_capacity_bytes", phys)) or phys
    except Exception:
        pass
    return int(min(phys * 3 // 4, 96 * 1024 * 1024))


def _pick_tile(N, Cin, H, dtype_bytes, budget):
    """Largest row-tile (multiple of 8, <=512) that fits the VMEM budget."""
    cin_pad = max(_round_up(Cin, 128), 128)
    h_pad = max(_round_up(H, 128), 128)
    # Resident (N, Cin->128-lane) f32 accumulators/inputs (generous x3) + misc.
    resident = 3 * N * cin_pad * 4 + 2 * 1024 * 1024
    # Per-row cost: double-buffered U tile + X tile + hidden tile.
    per_row = 2 * N * dtype_bytes + 2 * cin_pad * dtype_bytes + 2 * h_pad * 4
    avail = max(budget - resident, 8 * per_row)
    tm = (avail // per_row) // 8 * 8
    return int(max(8, min(512, tm)))


def _divisor_tile(n_pad, tm_max):
    """Largest multiple of 8 <= tm_max that divides n_pad (n_pad % 8 == 0)."""
    t = max(8, min(tm_max, n_pad) // 8 * 8)
    while t > 8 and n_pad % t != 0:
        t -= 8
    return t


# --------------------------------------------------------------------------
# Fused single-kernel path (small / moderate N: everything resident in VMEM).
# --------------------------------------------------------------------------
def _fused_kernel(x_ref, la_ref, u_ref, w_ref, bw_ref, g_ref, b_ref, m_ref,
                  bm_ref, logp_ref, hid_ref, *, ve, ve2):
    f32 = jnp.float32
    U = u_ref[...]                     # (N, N)  compute dtype (f32 or bf16)
    cd = U.dtype
    X = x_ref[...]                     # (N, Cin) compute dtype
    la = la_ref[...]                   # (N, 1)   f32

    # Y = U^T @ X  (no explicit transpose).
    Y = jax.lax.dot_general(U, X, _DN_T, preferred_element_type=f32)
    # Diagonal spectral scale applied to the SMALL (N, Cin) operand, never to U.
    Ys = _pow_const(la, ve) * Y
    Z1 = jnp.dot(U, Ys.astype(cd), preferred_element_type=f32)
    Y2 = jax.lax.dot_general(U, Z1.astype(cd), _DN_T, preferred_element_type=f32)
    if ve2 != 0.0:
        Y2 = _pow_const((2.0 * (la - 1e-8) - 1.0) ** 2 + 1.0, ve2) * Y2
    Z2 = jnp.dot(U, Y2.astype(cd), preferred_element_type=f32)

    # Linear W -> hidden embedding.
    H0 = jnp.dot(Z2, w_ref[...], preferred_element_type=f32) + bw_ref[...]
    hid_ref[...] = H0

    # BatchNorm1d over nodes (training-style biased batch stats).
    inv_n = 1.0 / float(H0.shape[0])
    mean = jnp.sum(H0, axis=0, keepdims=True) * inv_n
    var = jnp.maximum(jnp.sum(H0 * H0, axis=0, keepdims=True) * inv_n
                      - mean * mean, 0.0)
    Hn = (H0 - mean) * jax.lax.rsqrt(var + 1e-5) * g_ref[...] + b_ref[...]

    # ReLU (+ eval-mode dropout == identity), MLP, log_softmax(dim=1).
    Hn = jnp.maximum(Hn, 0.0)
    logits = jnp.dot(Hn, m_ref[...], preferred_element_type=f32) + bm_ref[...]
    mx = jnp.max(logits, axis=1, keepdims=True)
    sh = logits - mx
    logp_ref[...] = sh - jnp.log(jnp.sum(jnp.exp(sh), axis=1, keepdims=True))


# --------------------------------------------------------------------------
# Row-tiled multi-pass path (large N): stream (tm, N) blocks of U with
# resident VMEM accumulators and streaming BatchNorm statistics.
# --------------------------------------------------------------------------
def _p1_kernel(u_ref, x_ref, y_ref):
    """Accumulate Y = U^T @ X over row tiles of U and X."""
    @pl.when(pl.program_id(0) == 0)
    def _():
        y_ref[...] = jnp.zeros_like(y_ref)
    y_ref[...] += jax.lax.dot_general(u_ref[...], x_ref[...], _DN_T,
                                      preferred_element_type=jnp.float32)


def _p2_kernel(u_ref, ys_ref, y2_ref):
    """Per tile: Z1 = U_tile @ Ys ; accumulate Y2 = U^T @ Z1 (Ys pre-scaled)."""
    @pl.when(pl.program_id(0) == 0)
    def _():
        y2_ref[...] = jnp.zeros_like(y2_ref)
    U = u_ref[...]
    Z1 = jnp.dot(U, ys_ref[...].astype(U.dtype),
                 preferred_element_type=jnp.float32)          # (tm, Cin)
    y2_ref[...] += jax.lax.dot_general(U, Z1.astype(U.dtype), _DN_T,
                                       preferred_element_type=jnp.float32)


def _p3_kernel(u_ref, ys2_ref, w_ref, bw_ref, hid_ref, sum_ref, ssq_ref,
               *, n_valid, mask_rows):
    """Per tile: Z2 = U_tile @ Ys2, hidden = Z2 @ W + b, stream BN stats."""
    i = pl.program_id(0)

    @pl.when(i == 0)
    def _():
        sum_ref[...] = jnp.zeros_like(sum_ref)
        ssq_ref[...] = jnp.zeros_like(ssq_ref)

    U = u_ref[...]
    Z2 = jnp.dot(U, ys2_ref[...].astype(U.dtype),
                 preferred_element_type=jnp.float32)          # (tm, Cin)
    H0 = jnp.dot(Z2, w_ref[...], preferred_element_type=jnp.float32) + bw_ref[...]
    hid_ref[...] = H0

    if mask_rows:  # only for padded (ragged-N) runs
        tm = H0.shape[0]
        rows = i * tm + jax.lax.broadcasted_iota(jnp.int32, H0.shape, 0)
        Hm = jnp.where(rows < n_valid, H0, 0.0)
    else:
        Hm = H0
    sum_ref[...] += jnp.sum(Hm, axis=0, keepdims=True)
    ssq_ref[...] += jnp.sum(Hm * Hm, axis=0, keepdims=True)


def _p4_kernel(hid_ref, sum_ref, ssq_ref, g_ref, b_ref, m_ref, bm_ref,
               logp_ref, *, n_valid):
    """Per tile: BatchNorm(finalized stats) + ReLU + MLP + log_softmax."""
    inv_n = 1.0 / float(n_valid)
    mean = sum_ref[...] * inv_n
    var = jnp.maximum(ssq_ref[...] * inv_n - mean * mean, 0.0)
    Hn = (hid_ref[...] - mean) * jax.lax.rsqrt(var + 1e-5) * g_ref[...] + b_ref[...]
    Hn = jnp.maximum(Hn, 0.0)
    logits = jnp.dot(Hn, m_ref[...], preferred_element_type=jnp.float32) + bm_ref[...]
    mx = jnp.max(logits, axis=1, keepdims=True)
    sh = logits - mx
    logp_ref[...] = sh - jnp.log(jnp.sum(jnp.exp(sh), axis=1, keepdims=True))


def _slog_b_tiled(Xc, Uc, vla_col, vla2_col, Wt, bW, g, b, Mt, bM,
                  block_rows, budget):
    N, Cin = Xc.shape
    H = Wt.shape[1]
    Cout = Mt.shape[1]
    db = jnp.dtype(Uc.dtype).itemsize

    # --- tile-size selection (VMEM-budget- and divisor-aware, no U pad in the
    # common N % 8 == 0 case) ---
    if block_rows is not None:
        tm = max(8, _round_up(int(block_rows), 8))
        N_pad = _round_up(N, tm)
    else:
        tm_target = min(_pick_tile(N, Cin, H, db, budget), _round_up(N, 8))
        n_pad8 = _round_up(N, 8)
        tm = _divisor_tile(n_pad8, tm_target)
        if tm * 2 < tm_target:
            # Divisors of N are all tiny: accept a one-off padded copy of U.
            tm = tm_target
            N_pad = _round_up(N, tm)
        else:
            N_pad = n_pad8
    n_tiles = N_pad // tm
    if N_pad != N:
        Uc = jnp.pad(Uc, ((0, N_pad - N), (0, 0)))
        Xc = jnp.pad(Xc, ((0, N_pad - N), (0, 0)))
    mask_rows = (N_pad != N)

    cp_arb = pltpu.CompilerParams(dimension_semantics=("arbitrary",),
                                  vmem_limit_bytes=budget)
    cp_par = pltpu.CompilerParams(dimension_semantics=("parallel",),
                                  vmem_limit_bytes=budget)

    u_spec = pl.BlockSpec((tm, N), lambda i: (i, 0))

    def full(shape):
        return pl.BlockSpec(shape, lambda i: (0, 0))

    # Phase 1: Y = U^T @ X (resident [N, Cin] accumulator).
    Y = pl.pallas_call(
        _p1_kernel,
        grid=(n_tiles,),
        in_specs=[u_spec, pl.BlockSpec((tm, Cin), lambda i: (i, 0))],
        out_specs=full((N, Cin)),
        out_shape=jax.ShapeDtypeStruct((N, Cin), jnp.float32),
        compiler_params=cp_arb,
    )(Uc, Xc)

    # Diagonal spectral scale on the small (N, Cin) operand, hoisted out of the
    # grid loop: one O(N*Cin) elementwise op, negligible vs N^2 streaming of U.
    Ys = vla_col * Y

    # Phase 2: Y2 = U^T @ (U @ Ys).
    Y2 = pl.pallas_call(
        _p2_kernel,
        grid=(n_tiles,),
        in_specs=[u_spec, full((N, Cin))],
        out_specs=full((N, Cin)),
        out_shape=jax.ShapeDtypeStruct((N, Cin), jnp.float32),
        compiler_params=cp_arb,
    )(Uc, Ys)

    Ys2 = Y2 if vla2_col is None else vla2_col * Y2   # ve2 == 0 -> identity

    # Phase 3: hidden = (U @ Ys2) @ W + b, plus streaming BN stats.
    hid_p, s, ss = pl.pallas_call(
        functools.partial(_p3_kernel, n_valid=N, mask_rows=mask_rows),
        grid=(n_tiles,),
        in_specs=[u_spec, full((N, Cin)), full((Cin, H)), full((1, H))],
        out_specs=(pl.BlockSpec((tm, H), lambda i: (i, 0)),
                   full((1, H)), full((1, H))),
        out_shape=(jax.ShapeDtypeStruct((N_pad, H), jnp.float32),
                   jax.ShapeDtypeStruct((1, H), jnp.float32),
                   jax.ShapeDtypeStruct((1, H), jnp.float32)),
        compiler_params=cp_arb,
    )(Uc, Ys2, Wt, bW)

    # Phase 4: BN + ReLU + MLP + log_softmax per row tile.
    logp_p = pl.pallas_call(
        functools.partial(_p4_kernel, n_valid=N),
        grid=(n_tiles,),
        in_specs=[pl.BlockSpec((tm, H), lambda i: (i, 0)),
                  full((1, H)), full((1, H)), full((1, H)), full((1, H)),
                  full((H, Cout)), full((1, Cout))],
        out_specs=pl.BlockSpec((tm, Cout), lambda i: (i, 0)),
        out_shape=jax.ShapeDtypeStruct((N_pad, Cout), jnp.float32),
        compiler_params=cp_par,
    )(hid_p, s, ss, g, b, Mt, bM)

    return logp_p[:N], hid_p[:N]


# --------------------------------------------------------------------------
# Public wrapper.
# --------------------------------------------------------------------------
def slog_b_forward(X, La, U, W, b_W, gamma, beta, M, b_M, ve=7.0, ve2=0.0, *,
                   mxu_dtype=jnp.float32, block_rows=None, force_tiled=False):
    """X:[N,Cin]  La:[N]  U:[N,N]  W:[H,Cin] b_W:[H]  M:[Cout,H] b_M:[Cout].

    ve / ve2 are trace-time Python constants. mxu_dtype=jnp.bfloat16 halves the
    dominant HBM traffic of U (cast happens in the wrapper so the streamed
    tiles are bf16 in HBM); f32 default preserves reference numerics."""
    N, Cin = X.shape
    H = W.shape[0]
    Cout = M.shape[0]
    ve = float(ve)
    ve2 = float(ve2)

    # Glue: reshape / pre-transpose parameters (kernels do row-major matmuls).
    Laf = jnp.asarray(La, jnp.float32).reshape(N, 1)
    Wt = jnp.asarray(W, jnp.float32).T                   # (Cin, H)
    bW = jnp.asarray(b_W, jnp.float32).reshape(1, H)
    Mt = jnp.asarray(M, jnp.float32).T                   # (H, Cout)
    bM = jnp.asarray(b_M, jnp.float32).reshape(1, Cout)
    g = jnp.asarray(gamma, jnp.float32).reshape(1, H)
    b = jnp.asarray(beta, jnp.float32).reshape(1, H)

    # Cast U / X to the MXU dtype BEFORE pallas_call so HBM tiles are narrow.
    cd = jnp.dtype(mxu_dtype)
    Uc = jnp.asarray(U).astype(cd)
    Xc = jnp.asarray(X).astype(cd)

    budget = _vmem_budget_bytes()
    db = cd.itemsize

    # Fused-path VMEM estimate: (8,128)-padded U + X + a handful of (N, Cin)
    # f32 intermediates (the scaled N x N copy of U no longer exists).
    cin_pad = max(_round_up(Cin, 128), 128)
    n8 = _round_up(N, 8)
    est_fused = (int(1.25 * n8 * _round_up(N, 128) * db)
                 + n8 * cin_pad * db
                 + 6 * n8 * cin_pad * 4
                 + 4 * 1024 * 1024)

    if (not force_tiled) and est_fused <= budget:
        vmem = pl.BlockSpec(memory_space=pltpu.MemorySpace.VMEM)
        logp, hid = pl.pallas_call(
            functools.partial(_fused_kernel, ve=ve, ve2=ve2),
            out_shape=(jax.ShapeDtypeStruct((N, Cout), jnp.float32),
                       jax.ShapeDtypeStruct((N, H), jnp.float32)),
            in_specs=[vmem] * 9,
            out_specs=(vmem, vmem),
            compiler_params=pltpu.CompilerParams(vmem_limit_bytes=budget),
        )(Xc, Laf, Uc, Wt, bW, g, b, Mt, bM)
        return logp, hid

    # Tiled path: pow(La, ve) and the diagonal scales are computed once,
    # wrapper-side (O(N) / O(N*Cin)), instead of per grid step.
    vla_col = _pow_const(Laf, ve)
    vla2_col = (None if ve2 == 0.0 else
                _pow_const((2.0 * (Laf - 1e-8) - 1.0) ** 2 + 1.0, ve2))
    return _slog_b_tiled(Xc, Uc, vla_col, vla2_col, Wt, bW, g, b, Mt, bM,
                         block_rows, budget)


if __name__ == "__main__":
    # Small shapes consistent with the module: N nodes, in/hidden/out features.
    N, Cin, H, Cout = 16, 8, 32, 8

    key = jax.random.PRNGKey(0)
    kx, kla, ku, kw, kbw, km, kbm = jax.random.split(key, 7)

    X = jax.random.normal(kx, (N, Cin), jnp.float32)
    # Positive eigenvalues (normalized-Laplacian-like spectrum in (0, 2)).
    La = jax.random.uniform(kla, (N,), jnp.float32, minval=0.1, maxval=2.0)
    # Orthonormal eigenvector matrix via QR.
    U, _ = jnp.linalg.qr(jax.random.normal(ku, (N, N), jnp.float32))

    W = jax.random.normal(kw, (H, Cin), jnp.float32) * 0.1    # Linear(Cin,H).weight
    b_W = jax.random.normal(kbw, (H,), jnp.float32) * 0.01
    M = jax.random.normal(km, (Cout, H), jnp.float32) * 0.1   # Linear(H,Cout).weight
    b_M = jax.random.normal(kbm, (Cout,), jnp.float32) * 0.01
    gamma = jnp.ones((H,), jnp.float32)                       # BatchNorm1d.weight
    beta = jnp.zeros((H,), jnp.float32)                       # BatchNorm1d.bias
    ve, ve2 = 7.0, 0.0                                        # Velocity(7), Velocity(0)

    # Fused single-kernel path (default dispatch at this N).
    logp, hidden = slog_b_forward(X, La, U, W, b_W, gamma, beta, M, b_M, ve, ve2)
    jax.block_until_ready((logp, hidden))
    assert logp.shape == (N, Cout) and hidden.shape == (N, H)
    assert bool(jnp.all(jnp.isfinite(logp))) and bool(jnp.all(jnp.isfinite(hidden)))

    # Exercise and validate the row-tiled / streaming-BN path (2 tiles of 8).
    logp_t, hidden_t = slog_b_forward(X, La, U, W, b_W, gamma, beta, M, b_M,
                                      ve, ve2, force_tiled=True, block_rows=8)
    jax.block_until_ready((logp_t, hidden_t))
    assert logp_t.shape == (N, Cout) and hidden_t.shape == (N, H)
    assert bool(jnp.allclose(hidden_t, hidden, atol=1e-3, rtol=1e-3))
    assert bool(jnp.allclose(logp_t, logp, atol=1e-3, rtol=1e-3))

    # Smoke-test the bf16-streamed-U option (numerics intentionally looser).
    logp_bf, hidden_bf = slog_b_forward(X, La, U, W, b_W, gamma, beta, M, b_M,
                                        ve, ve2, mxu_dtype=jnp.bfloat16,
                                        force_tiled=True, block_rows=8)
    jax.block_until_ready((logp_bf, hidden_bf))
    assert bool(jnp.all(jnp.isfinite(logp_bf)))
    assert bool(jnp.all(jnp.isfinite(hidden_bf)))

    print("KERNEL_OK")
</pallas_src>

<mosaic_0001>
module attributes {stable_mosaic.version = 11 : i64} {
  func.func @_fused_kernel(%arg0: memref<16x8xf32, #tpu.memory_space<vmem>>, %arg1: memref<16x1xf32, #tpu.memory_space<vmem>>, %arg2: memref<16x16xf32, #tpu.memory_space<vmem>>, %arg3: memref<8x32xf32, #tpu.memory_space<vmem>>, %arg4: memref<1x32xf32, #tpu.memory_space<vmem>>, %arg5: memref<1x32xf32, #tpu.memory_space<vmem>>, %arg6: memref<1x32xf32, #tpu.memory_space<vmem>>, %arg7: memref<32x8xf32, #tpu.memory_space<vmem>>, %arg8: memref<1x8xf32, #tpu.memory_space<vmem>>, %arg9: memref<16x8xf32, #tpu.memory_space<vmem>>, %arg10: memref<16x32xf32, #tpu.memory_space<vmem>>) attributes {dimension_semantics = [], scalar_prefetch = 0 : i64, scratch_operands = 0 : i64, tpu.core_type = #tpu.core_type<tc>} {
    %c0 = arith.constant 0 : index
    %c0_0 = arith.constant 0 : index
    %0 = vector.load %arg2[%c0, %c0_0] : memref<16x16xf32, #tpu.memory_space<vmem>>, vector<16x16xf32>
    %c0_1 = arith.constant 0 : index
    %c0_2 = arith.constant 0 : index
    %1 = vector.load %arg0[%c0_1, %c0_2] : memref<16x8xf32, #tpu.memory_space<vmem>>, vector<16x8xf32>
    %c0_3 = arith.constant 0 : index
    %c0_4 = arith.constant 0 : index
    %2 = vector.load %arg1[%c0_3, %c0_4] : memref<16x1xf32, #tpu.memory_space<vmem>>, vector<16x1xf32>
    %cst = arith.constant dense<0.000000e+00> : vector<16x8xf32>
    %3 = tpu.matmul %0, %1, %cst {dimension_numbers = #tpu.dot_dimension_numbers<[0], [0], [1], [1], [0, 1, 1, 1], [], []>} : vector<16x16xf32>, vector<16x8xf32>, vector<16x8xf32> -> vector<16x8xf32>
    %4 = arith.mulf %2, %2 : vector<16x1xf32>
    %5 = arith.mulf %2, %4 : vector<16x1xf32>
    %6 = arith.mulf %4, %4 : vector<16x1xf32>
    %7 = arith.mulf %5, %6 : vector<16x1xf32>
    %8 = vector.broadcast %7 : vector<16x1xf32> to vector<16x8xf32>
    %9 = arith.mulf %8, %3 : vector<16x8xf32>
    %cst_5 = arith.constant dense<0.000000e+00> : vector<16x8xf32>
    %10 = tpu.matmul %0, %9, %cst_5 {dimension_numbers = #tpu.dot_dimension_numbers<[1], [0], [0], [1], [0, 0, 1, 1], [], []>} : vector<16x16xf32>, vector<16x8xf32>, vector<16x8xf32> -> vector<16x8xf32>
    %cst_6 = arith.constant dense<0.000000e+00> : vector<16x8xf32>
    %11 = tpu.matmul %0, %10, %cst_6 {dimension_numbers = #tpu.dot_dimension_numbers<[0], [0], [1], [1], [0, 1, 1, 1], [], []>} : vector<16x16xf32>, vector<16x8xf32>, vector<16x8xf32> -> vector<16x8xf32>
    %cst_7 = arith.constant dense<0.000000e+00> : vector<16x8xf32>
    %12 = tpu.matmul %0, %11, %cst_7 {dimension_numbers = #tpu.dot_dimension_numbers<[1], [0], [0], [1], [0, 0, 1, 1], [], []>} : vector<16x16xf32>, vector<16x8xf32>, vector<16x8xf32> -> vector<16x8xf32>
    %c0_8 = arith.constant 0 : index
    %c0_9 = arith.constant 0 : index
    %13 = vector.load %arg3[%c0_8, %c0_9] : memref<8x32xf32, #tpu.memory_space<vmem>>, vector<8x32xf32>
    %cst_10 = arith.constant dense<0.000000e+00> : vector<16x32xf32>
    %14 = tpu.matmul %12, %13, %cst_10 {dimension_numbers = #tpu.dot_dimension_numbers<[1], [0], [0], [1], [0, 0, 1, 1], [], []>} : vector<16x8xf32>, vector<8x32xf32>, vector<16x32xf32> -> vector<16x32xf32>
    %c0_11 = arith.constant 0 : index
    %c0_12 = arith.constant 0 : index
    %15 = vector.load %arg4[%c0_11, %c0_12] : memref<1x32xf32, #tpu.memory_space<vmem>>, vector<1x32xf32>
    %16 = vector.broadcast %15 : vector<1x32xf32> to vector<16x32xf32>
    %17 = arith.addf %14, %16 : vector<16x32xf32>
    %c0_13 = arith.constant 0 : index
    %c0_14 = arith.constant 0 : index
    %18 = vector.load %arg10[%c0_13, %c0_14] : memref<16x32xf32, #tpu.memory_space<vmem>>, vector<16x32xf32>
    tpu.vector_store %arg10[%c0_13, %c0_14], %17 {strides = array<i32>} : memref<16x32xf32, #tpu.memory_space<vmem>>, vector<16x32xf32>,
    %cst_15 = arith.constant dense<0.000000e+00> : vector<32xf32>
    %19 = vector.multi_reduction <add>, %17, %cst_15 [0] : vector<16x32xf32> to vector<32xf32>
    %20 = vector.shape_cast %19 : vector<32xf32> to vector<1x32xf32>
    %cst_16 = arith.constant 6.250000e-02 : f32
    %21 = vector.broadcast %cst_16 : f32 to vector<1x32xf32>
    %22 = arith.mulf %20, %21 : vector<1x32xf32>
    %23 = arith.mulf %17, %17 : vector<16x32xf32>
    %cst_17 = arith.constant dense<0.000000e+00> : vector<32xf32>
    %24 = vector.multi_reduction <add>, %23, %cst_17 [0] : vector<16x32xf32> to vector<32xf32>
    %25 = vector.shape_cast %24 : vector<32xf32> to vector<1x32xf32>
    %cst_18 = arith.constant 6.250000e-02 : f32
    %26 = vector.broadcast %cst_18 : f32 to vector<1x32xf32>
    %27 = arith.mulf %25, %26 : vector<1x32xf32>
    %28 = arith.mulf %22, %22 : vector<1x32xf32>
    %29 = arith.subf %27, %28 : vector<1x32xf32>
    %cst_19 = arith.constant 0.000000e+00 : f32
    %30 = vector.broadcast %cst_19 : f32 to vector<1x32xf32>
    %31 = arith.maximumf %29, %30 : vector<1x32xf32>
    %32 = vector.broadcast %22 : vector<1x32xf32> to vector<16x32xf32>
    %33 = arith.subf %17, %32 : vector<16x32xf32>
    %cst_20 = arith.constant 9.99999974E-6 : f32
    %34 = vector.broadcast %cst_20 : f32 to vector<1x32xf32>
    %35 = arith.addf %31, %34 : vector<1x32xf32>
    %36 = math.rsqrt %35 : vector<1x32xf32>
    %37 = vector.broadcast %36 : vector<1x32xf32> to vector<16x32xf32>
    %38 = arith.mulf %33, %37 : vector<16x32xf32>
    %c0_21 = arith.constant 0 : index
    %c0_22 = arith.constant 0 : index
    %39 = vector.load %arg5[%c0_21, %c0_22] : memref<1x32xf32, #tpu.memory_space<vmem>>, vector<1x32xf32>
    %40 = vector.broadcast %39 : vector<1x32xf32> to vector<16x32xf32>
    %41 = arith.mulf %38, %40 : vector<16x32xf32>
    %c0_23 = arith.constant 0 : index
    %c0_24 = arith.constant 0 : index
    %42 = vector.load %arg6[%c0_23, %c0_24] : memref<1x32xf32, #tpu.memory_space<vmem>>, vector<1x32xf32>
    %43 = vector.broadcast %42 : vector<1x32xf32> to vector<16x32xf32>
    %44 = arith.addf %41, %43 : vector<16x32xf32>
    %cst_25 = arith.constant 0.000000e+00 : f32
    %45 = vector.broadcast %cst_25 : f32 to vector<16x32xf32>
    %46 = arith.maximumf %44, %45 : vector<16x32xf32>
    %c0_26 = arith.constant 0 : index
    %c0_27 = arith.constant 0 : index
    %47 = vector.load %arg7[%c0_26, %c0_27] : memref<32x8xf32, #tpu.memory_space<vmem>>, vector<32x8xf32>
    %cst_28 = arith.constant dense<0.000000e+00> : vector<16x8xf32>
    %48 = tpu.matmul %46, %47, %cst_28 {dimension_numbers = #tpu.dot_dimension_numbers<[1], [0], [0], [1], [0, 0, 1, 1], [], []>} : vector<16x32xf32>, vector<32x8xf32>, vector<16x8xf32> -> vector<16x8xf32>
    %c0_29 = arith.constant 0 : index
    %c0_30 = arith.constant 0 : index
    %49 = vector.load %arg8[%c0_29, %c0_30] : memref<1x8xf32, #tpu.memory_space<vmem>>, vector<1x8xf32>
    %50 = vector.broadcast %49 : vector<1x8xf32> to vector<16x8xf32>
    %51 = arith.addf %48, %50 : vector<16x8xf32>
    %cst_31 = arith.constant dense<0xFF800000> : vector<16xf32>
    %52 = vector.multi_reduction <maximumf>, %51, %cst_31 [1] : vector<16x8xf32> to vector<16xf32>
    %53 = vector.shape_cast %52 : vector<16xf32> to vector<16x1xf32>
    %54 = vector.broadcast %53 : vector<16x1xf32> to vector<16x8xf32>
    %55 = arith.subf %51, %54 : vector<16x8xf32>
    %56 = math.exp %55 : vector<16x8xf32>
    %cst_32 = arith.constant dense<0.000000e+00> : vector<16xf32>
    %57 = vector.multi_reduction <add>, %56, %cst_32 [1] : vector<16x8xf32> to vector<16xf32>
    %58 = vector.shape_cast %57 : vector<16xf32> to vector<16x1xf32>
    %59 = math.log %58 : vector<16x1xf32>
    %60 = vector.broadcast %59 : vector<16x1xf32> to vector<16x8xf32>
    %61 = arith.subf %55, %60 : vector<16x8xf32>
    %c0_33 = arith.constant 0 : index
    %c0_34 = arith.constant 0 : index
    %62 = vector.load %arg9[%c0_33, %c0_34] : memref<16x8xf32, #tpu.memory_space<vmem>>, vector<16x8xf32>
    tpu.vector_store %arg9[%c0_33, %c0_34], %61 {strides = array<i32>} : memref<16x8xf32, #tpu.memory_space<vmem>>, vector<16x8xf32>,
    return
  }
}

</mosaic_0001>

<llo_original>
// kernel: tpu_custom_call.1
$region0: #{tpu_custom_call.1}
  #allocation0 [shape = 'u32[]', space=smem, size = 0x4, offset = 0x4, fixed_abs, tag = 'smem constant byte address 0x4 - core index']
  #allocation1 [shape = 'u32[72,128]{1,0:T(1,128)}', space=vmem, size = 0x9000, scoped, tag = 'internal scratch']
  %s0 = inlined_call_operand.vmem [shape: f32[16,8], index: 0, kind: input, shape index: {}]
  %s1 = inlined_call_operand.vmem [shape: f32[16,1], index: 1, kind: input, shape index: {}]
  %s2 = inlined_call_operand.vmem [shape: f32[16,16], index: 2, kind: input, shape index: {}]
  %s3 = inlined_call_operand.vmem [shape: f32[8,32], index: 3, kind: input, shape index: {}]
  %s4 = inlined_call_operand.vmem [shape: f32[1,32], index: 4, kind: input, shape index: {}]
  %s5 = inlined_call_operand.vmem [shape: f32[1,32], index: 5, kind: input, shape index: {}]
  %s6 = inlined_call_operand.vmem [shape: f32[1,32], index: 6, kind: input, shape index: {}]
  %s7 = inlined_call_operand.vmem [shape: f32[32,8], index: 7, kind: input, shape index: {}]
  %s8 = inlined_call_operand.vmem [shape: f32[1,8], index: 8, kind: input, shape index: {}]
  %s9 = inlined_call_operand.vmem [shape: f32[16,8], index: 9, kind: output, shape index: {0}]
  %s10 = inlined_call_operand.hbm [shape: f32[16,32], index: 10, kind: output, shape index: {1}]
  %11 = xla_tuple %s9, %s10
  %s12 = sld [smem:[#allocation0]]
  $region54: #{tpu_custom_call.1} parent=0
    _
  %s14 = ssub.s32 1, %s12
  %s15 = scalar_select 0, %s14, %s12
  $region1: #{tpu_custom_call.1} parent=0
    #allocation2 [shape = 'u8[8192]{0}', space=vmem, size = 0x2000, scoped, tag = 'output window, operand 1, single buffered']
    #allocation3 [shape = 's32[1]{0}', space=sflag, size = 0x4, scoped, tag = 'scoped memory for tpu_custom_call.1']
    %16 = vsyncpa [#allocation3], 0
    // Predicated region
    $region2: #{tpu_custom_call.1} parent=1 // pred_check
      _
    $region3: #{tpu_custom_call.1} parent=1 // pred_check_branch
      %18 = sbr.rel (0) target = $region5
    $region4: #{tpu_custom_call.1} parent=1 // pred_region
      _
    $region5: #{tpu_custom_call.1} parent=1 // pred_fallthru
      _
    // Predicated region
    $region6: #{tpu_custom_call.1} parent=1 // pred_check
      _
    $region7: #{tpu_custom_call.1} parent=1 // pred_check_branch
      %20 = sbr.rel (0) target = $region9
    $region8: #{tpu_custom_call.1} parent=1 // pred_region
      _
    $region9: #{tpu_custom_call.1} parent=1 // pred_fallthru
      _
    // Predicated region
    $region10: #{tpu_custom_call.1} parent=1 // pred_check
      _
    $region11: #{tpu_custom_call.1} parent=1 // pred_check_branch
      %22 = sbr.rel (0) target = $region13
    $region12: #{tpu_custom_call.1} parent=1 // pred_region
      _
    $region13: #{tpu_custom_call.1} parent=1 // pred_fallthru
      _
    // Predicated region
    $region14: #{tpu_custom_call.1} parent=1 // pred_check
      _
    $region15: #{tpu_custom_call.1} parent=1 // pred_check_branch
      %24 = sbr.rel (0) target = $region17
    $region16: #{tpu_custom_call.1} parent=1 // pred_region
      _
    $region17: #{tpu_custom_call.1} parent=1 // pred_fallthru
      _
    // Predicated region
    $region18: #{tpu_custom_call.1} parent=1 // pred_check
      _
    $region19: #{tpu_custom_call.1} parent=1 // pred_check_branch
      %26 = sbr.rel (0) target = $region21
    $region20: #{tpu_custom_call.1} parent=1 // pred_region
      _
    $region21: #{tpu_custom_call.1} parent=1 // pred_fallthru
      _
    // Predicated region
    $region22: #{tpu_custom_call.1} parent=1 // pred_check
      _
    $region23: #{tpu_custom_call.1} parent=1 // pred_check_branch
      %28 = sbr.rel (0) target = $region25
    $region24: #{tpu_custom_call.1} parent=1 // pred_region
      _
    $region25: #{tpu_custom_call.1} parent=1 // pred_fallthru
      _
    // Predicated region
    $region26: #{tpu_custom_call.1} parent=1 // pred_check
      _
    $region27: #{tpu_custom_call.1} parent=1 // pred_check_branch
      %30 = sbr.rel (0) target = $region29
    $region28: #{tpu_custom_call.1} parent=1 // pred_region
      _
    $region29: #{tpu_custom_call.1} parent=1 // pred_fallthru
      _
    // Predicated region
    $region30: #{tpu_custom_call.1} parent=1 // pred_check
      _
    $region31: #{tpu_custom_call.1} parent=1 // pred_check_branch
      %32 = sbr.rel (0) target = $region33
    $region32: #{tpu_custom_call.1} parent=1 // pred_region
      _
    $region33: #{tpu_custom_call.1} parent=1 // pred_fallthru
      _
    // Predicated region
    $region34: #{tpu_custom_call.1} parent=1 // pred_check
      _
    $region35: #{tpu_custom_call.1} parent=1 // pred_check_branch
      %34 = sbr.rel (0) target = $region37
    $region36: #{tpu_custom_call.1} parent=1 // pred_region
      _
    $region37: #{tpu_custom_call.1} parent=1 // pred_fallthru
      _
    %v35 = vld [vmem:[%s2] sm:$0xff]
    %v36 = vld [vmem:[%s2 + $0x8] sm:$0xff]
    %v37 = vld [vmem:[%s0] sm:$0xff]
    %v38 = vld [vmem:[%s0 + $0x8] sm:$0xff]
    %v39 = vld [vmem:[%s1] sm:$0xff]
    %v40 = vld [vmem:[%s1 + $0x8] sm:$0xff]
    %41 = vxpose.xlu0.b32.start [1/16] %v35, 128
    %42 = vxpose.xlu0.b32.cont [2/16] %v36, 128
    %43 = vxpose.xlu0.b32.cont [3/16] 0.0, 128
    %44 = vxpose.xlu0.b32.cont [4/16] 0.0, 128
    %45 = vxpose.xlu0.b32.cont [5/16] 0.0, 128
    %46 = vxpose.xlu0.b32.cont [6/16] 0.0, 128
    %47 = vxpose.xlu0.b32.cont [7/16] 0.0, 128
    %48 = vxpose.xlu0.b32.cont [8/16] 0.0, 128
    %49 = vxpose.xlu0.b32.cont [9/16] 0.0, 128
    %50 = vxpose.xlu0.b32.cont [10/16] 0.0, 128
    %51 = vxpose.xlu0.b32.cont [11/16] 0.0, 128
    %52 = vxpose.xlu0.b32.cont [12/16] 0.0, 128
    %53 = vxpose.xlu0.b32.cont [13/16] 0.0, 128
    %54 = vxpose.xlu0.b32.cont [14/16] 0.0, 128
    %55 = vxpose.xlu0.b32.cont [15/16] 0.0, 128
    %56 = vxpose.xlu0.b32.end [16/16] 0.0, 128
    %v57 = vpop.trf.xlu0
    %v58 = vpop.trf.xlu0
    %v59 = vpop.trf.xlu0
    %v60 = vpop.trf.xlu0
    %v61 = vpop.trf.xlu0
    %v62 = vpop.trf.xlu0
    %v63 = vpop.trf.xlu0
    %v64 = vpop.trf.xlu0
    %v65 = vpop.trf.xlu0
    %v66 = vpop.trf.xlu0
    %v67 = vpop.trf.xlu0
    %v68 = vpop.trf.xlu0
    %v69 = vpop.trf.xlu0
    %v70 = vpop.trf.xlu0
    %v71 = vpop.trf.xlu0
    %v72 = vpop.trf.xlu0
    %vm73 = vcmask 130048
    %v75 = vsel %vm73, %v57, 0
    %v78 = vsel %vm73, %v58, 0
    %80 = vmatpush.msra.mxu0 0.0
    %81 = vmatpush.msra.mxu0 0.0
    %82 = vmatpush.msra.mxu0 0.0
    %83 = vmatpush.msra.mxu0 0.0
    %84 = vmatpush.msra.mxu0 0.0
    %85 = vmatpush.msra.mxu0 0.0
    %86 = vmatpush.msra.mxu0 0.0
    %87 = vmatpush.msra.mxu0 0.0
    %88 = vmatpush.msra.mxu0 0.0
    %89 = vmatpush.msra.mxu0 0.0
    %90 = vmatpush.msra.mxu0 0.0
    %91 = vmatpush.msra.mxu0 0.0
    %92 = vmatpush.msra.mxu0 0.0
    %93 = vmatpush.msra.mxu0 0.0
    %94 = vmatpush.msra.mxu0 %v38
    %95 = vmatpush.msra.mxu0 %v37
    %96 = vmatmul.f32.gmra.mxu0 %v75
    %v97 = vpop.f32.mrf.mxu0
    %v98 = vadd.f32 0.0, %v97
    %99 = vmatmul.f32.gmra.mxu0 %v78
    %v100 = vpop.f32.mrf.mxu0
    %v101 = vadd.f32 0.0, %v100
    %102 = vdwg.mxu0
    %v103 = vmul.f32 %v39, %v39
    %v104 = vmul.f32 %v40, %v40
    %v105 = vmul.f32 %v39, %v103
    %v106 = vmul.f32 %v40, %v104
    %v107 = vmul.f32 %v103, %v103
    %v108 = vmul.f32 %v104, %v104
    %v109 = vmul.f32 %v105, %v107
    %v110 = vmul.f32 %v106, %v108
    %112 = vset.pattern.permute.xlu0 0
    %113 = vperm.xlu0 %112, %v109
    %v114 = vpop.permute.xlu0 %113
    %117 = vset.pattern.permute.xlu0 0
    %118 = vperm.xlu0 %117, %v110
    %v119 = vpop.permute.xlu0 %118
    %v121 = vmul.f32 %v114, %v98
    %v122 = vmul.f32 %v119, %v101
    %v124 = vsel %vm73, %v35, 0
    %v127 = vsel %vm73, %v36, 0
    %129 = vmatpush.msra.mxu0 0.0
    %130 = vmatpush.msra.mxu0 0.0
    %131 = vmatpush.msra.mxu0 0.0
    %132 = vmatpush.msra.mxu0 0.0
    %133 = vmatpush.msra.mxu0 0.0
    %134 = vmatpush.msra.mxu0 0.0
    %135 = vmatpush.msra.mxu0 0.0
    %136 = vmatpush.msra.mxu0 0.0
    %137 = vmatpush.msra.mxu0 0.0
    %138 = vmatpush.msra.mxu0 0.0
    %139 = vmatpush.msra.mxu0 0.0
    %140 = vmatpush.msra.mxu0 0.0
    %141 = vmatpush.msra.mxu0 0.0
    %142 = vmatpush.msra.mxu0 0.0
    %143 = vmatpush.msra.mxu0 %v122
    %144 = vmatpush.msra.mxu0 %v121
    %145 = vmatmul.f32.gmra.mxu0 %v124
    %v146 = vpop.f32.mrf.mxu0
    %v147 = vadd.f32 0.0, %v146
    %148 = vmatmul.f32.gmra.mxu0 %v127
    %v149 = vpop.f32.mrf.mxu0
    %v150 = vadd.f32 0.0, %v149
    %151 = vdwg.mxu0
    %152 = vmatpush.msra.mxu0 0.0
    %153 = vmatpush.msra.mxu0 0.0
    %154 = vmatpush.msra.mxu0 0.0
    %155 = vmatpush.msra.mxu0 0.0
    %156 = vmatpush.msra.mxu0 0.0
    %157 = vmatpush.msra.mxu0 0.0
    %158 = vmatpush.msra.mxu0 0.0
    %159 = vmatpush.msra.mxu0 0.0
    %160 = vmatpush.msra.mxu0 0.0
    %161 = vmatpush.msra.mxu0 0.0
    %162 = vmatpush.msra.mxu0 0.0
    %163 = vmatpush.msra.mxu0 0.0
    %164 = vmatpush.msra.mxu0 0.0
    %165 = vmatpush.msra.mxu0 0.0
    %166 = vmatpush.msra.mxu0 %v150
    %167 = vmatpush.msra.mxu0 %v147
    %168 = vmatmul.f32.gmra.mxu0 %v75
    %v169 = vpop.f32.mrf.mxu0
    %v170 = vadd.f32 0.0, %v169
    %171 = vmatmul.f32.gmra.mxu0 %v78
    %v172 = vpop.f32.mrf.mxu0
    %v173 = vadd.f32 0.0, %v172
    %174 = vdwg.mxu0
    %175 = vmatpush.msra.mxu0 0.0
    %176 = vmatpush.msra.mxu0 0.0
    %177 = vmatpush.msra.mxu0 0.0
    %178 = vmatpush.msra.mxu0 0.0
    %179 = vmatpush.msra.mxu0 0.0
    %180 = vmatpush.msra.mxu0 0.0
    %181 = vmatpush.msra.mxu0 0.0
    %182 = vmatpush.msra.mxu0 0.0
    %183 = vmatpush.msra.mxu0 0.0
    %184 = vmatpush.msra.mxu0 0.0
    %185 = vmatpush.msra.mxu0 0.0
    %186 = vmatpush.msra.mxu0 0.0
    %187 = vmatpush.msra.mxu0 0.0
    %188 = vmatpush.msra.mxu0 0.0
    %189 = vmatpush.msra.mxu0 %v173
    %190 = vmatpush.msra.mxu0 %v170
    %191 = vmatmul.f32.gmra.mxu0 %v124
    %v192 = vpop.f32.mrf.mxu0
    %v193 = vadd.f32 0.0, %v192
    %194 = vmatmul.f32.gmra.mxu0 %v127
    %v195 = vpop.f32.mrf.mxu0
    %v196 = vadd.f32 0.0, %v195
    %197 = vdwg.mxu0
    %v198 = vld [vmem:[%s3] sm:$0xff]
    %v199 = vld [vmem:[%s4] sm:$0x1]
    %v201 = vperm.slane %v199, 0
    %vm203 = vcmask 64512
    %v205 = vsel %vm203, %v193, 0
    %v208 = vsel %vm203, %v196, 0
    %210 = vmatpush.msra.mxu0 0.0
    %211 = vmatpush.msra.mxu0 0.0
    %212 = vmatpush.msra.mxu0 0.0
    %213 = vmatpush.msra.mxu0 0.0
    %214 = vmatpush.msra.mxu0 0.0
    %215 = vmatpush.msra.mxu0 0.0
    %216 = vmatpush.msra.mxu0 0.0
    %217 = vmatpush.msra.mxu0 0.0
    %218 = vmatpush.msra.mxu0 0.0
    %219 = vmatpush.msra.mxu0 0.0
    %220 = vmatpush.msra.mxu0 0.0
    %221 = vmatpush.msra.mxu0 0.0
    %222 = vmatpush.msra.mxu0 0.0
    %223 = vmatpush.msra.mxu0 0.0
    %224 = vmatpush.msra.mxu0 0.0
    %225 = vmatpush.msra.mxu0 %v198
    %226 = vmatmul.f32.gmra.mxu0 %v205
    %v227 = vpop.f32.mrf.mxu0
    %v228 = vadd.f32 %v201, %v227
    %229 = vmatmul.f32.gmra.mxu0 %v208
    %v230 = vpop.f32.mrf.mxu0
    %v231 = vadd.f32 %v201, %v230
    %232 = vdwg.mxu0
    %vm233 = vcmask 261120
    %234 = vst.msk [vmem:[#allocation2] sm:$0xff] %vm233, %v228
    %235 = vst.msk [vmem:[#allocation2 + $0x8] sm:$0xff] %vm233, %v231
    %v236 = vsel %vm233, %v228, 0.0
    %v237 = vsel %vm233, %v231, 0.0
    %v238 = vadd.f32 %v236, %v237
    %v239 = vrot.slane %v238, 4
    %v240 = vadd.f32 %v238, %v239
    %v241 = vrot.slane %v240, 2
    %v242 = vadd.f32 %v240, %v241
    %v243 = vrot.slane %v242, 1
    %v244 = vadd.f32 %v242, %v243
    %v245 = vmul.f32 %v244, 0.0625
    %v246 = vmul.f32 %v228, %v228
    %v247 = vmul.f32 %v231, %v231
    %v248 = vsel %vm233, %v246, 0.0
    %v249 = vsel %vm233, %v247, 0.0
    %v250 = vadd.f32 %v248, %v249
    %v251 = vrot.slane %v250, 4
    %v252 = vadd.f32 %v250, %v251
    %v253 = vrot.slane %v252, 2
    %v254 = vadd.f32 %v252, %v253
    %v255 = vrot.slane %v254, 1
    %v256 = vadd.f32 %v254, %v255
    %v257 = vmul.f32 %v256, 0.0625
    %v258 = vmul.f32 %v245, %v245
    %v259 = vsub.f32 %v257, %v258
    %v260 = vmax.f32 %v259, 0.0
    %v261 = vsub.f32 %v228, %v245
    %v262 = vsub.f32 %v231, %v245
    %v263 = vadd.f32 %v260, 1e-05
    %v264 = vrsqrt.pop %v263
    %v265 = vmul.f32 %v264, %v263
    %v266 = vmul.f32 %v265, %v264
    %v267 = vmul.f32 0.5, %v266
    %v268 = vsub.f32 1.5, %v267
    %v269 = vmul.f32 %v264, %v268
    %vm270 = vweird.f32 %v263
    %vm271 = vweird.f32 %v264
    %vm272 = vmor %vm270, %vm271
    %v273 = vsel %vm272, %v264, %v269
    %v274 = vmul.f32 %v261, %v273
    %v275 = vmul.f32 %v262, %v273
    %v276 = vld [vmem:[%s5] sm:$0x1]
    %v278 = vperm.slane %v276, 0
    %v280 = vmul.f32 %v274, %v278
    %v281 = vmul.f32 %v275, %v278
    %v282 = vld [vmem:[%s6] sm:$0x1]
    %v284 = vperm.slane %v282, 0
    %v286 = vadd.f32 %v280, %v284
    %v287 = vadd.f32 %v281, %v284
    %v288 = vmax.f32 %v286, 0.0
    %v289 = vmax.f32 %v287, 0.0
    %v290 = vld [vmem:[%s7] sm:$0xff]
    %v291 = vld [vmem:[%s7 + $0x8] sm:$0xff]
    %v292 = vld [vmem:[%s7 + $0x10] sm:$0xff]
    %v293 = vld [vmem:[%s7 + $0x18] sm:$0xff]
    %v294 = vld [vmem:[%s8] sm:$0x1]
    %v296 = vperm.slane %v294, 0
    %v299 = vsel %vm233, %v288, 0
    %v302 = vsel %vm233, %v289, 0
    %304 = vmatpush.msra.mxu0 0.0
    %305 = vmatpush.msra.mxu0 0.0
    %306 = vmatpush.msra.mxu0 0.0
    %307 = vmatpush.msra.mxu0 0.0
    %308 = vmatpush.msra.mxu0 0.0
    %309 = vmatpush.msra.mxu0 0.0
    %310 = vmatpush.msra.mxu0 0.0
    %311 = vmatpush.msra.mxu0 0.0
    %312 = vmatpush.msra.mxu0 0.0
    %313 = vmatpush.msra.mxu0 0.0
    %314 = vmatpush.msra.mxu0 0.0
    %315 = vmatpush.msra.mxu0 0.0
    %316 = vmatpush.msra.mxu0 %v293
    %317 = vmatpush.msra.mxu0 %v292
    %318 = vmatpush.msra.mxu0 %v291
    %319 = vmatpush.msra.mxu0 %v290
    %320 = vmatmul.f32.gmra.mxu0 %v299
    %v321 = vpop.f32.mrf.mxu0
    %v322 = vadd.f32 %v296, %v321
    %323 = vmatmul.f32.gmra.mxu0 %v302
    %v324 = vpop.f32.mrf.mxu0
    %v325 = vadd.f32 %v296, %v324
    %326 = vdwg.mxu0
    %v327 = vsel %vm203, %v322, -inf
    %328 = vmax.xlane.f32.xlu0 %v327
    %v329 = vpop.xlane.xlu0 %328
    %v330 = vsel %vm203, %v325, -inf
    %331 = vmax.xlane.f32.xlu0 %v330
    %v332 = vpop.xlane.xlu0 %331
    %v333 = vsub.f32 %v322, %v329
    %v334 = vsub.f32 %v325, %v332
    %v335 = vmul.f32 %v333, 1.442695
    %v336 = vpow.pop %v335
    %v337 = vmul.f32 %v334, 1.442695
    %v338 = vpow.pop %v337
    %v339 = vsel %vm203, %v336, 0.0
    %340 = vadd.xlane.f32.xlu0 %v339
    %v341 = vpop.xlane.xlu0 %340
    %v342 = vsel %vm203, %v338, 0.0
    %343 = vadd.xlane.f32.xlu0 %v342
    %v344 = vpop.xlane.xlu0 %343
    %v345 = vlog2.pop %v341
    %v346 = vmul.f32 %v345, 0.6931472
    %v347 = vlog2.pop %v344
    %v348 = vmul.f32 %v347, 0.6931472
    %v349 = vsub.f32 %v333, %v346
    %v350 = vsub.f32 %v334, %v348
    %351 = vst.msk [vmem:[%s9] sm:$0xff] %vm203, %v349
    %352 = vst.msk [vmem:[%s9 + $0x8] sm:$0xff] %vm203, %v350
    // Predicated region
    $region38: #{tpu_custom_call.1} parent=1 // pred_check
      _
    $region39: #{tpu_custom_call.1} parent=1 // pred_check_branch
      %354 = sbr.rel (0) target = $region41
    $region40: #{tpu_custom_call.1} parent=1 // pred_region
      _
    $region41: #{tpu_custom_call.1} parent=1 // pred_fallthru
      _
    // Predicated region
    $region42: #{tpu_custom_call.1} parent=1 // pred_check
      _
    $region43: #{tpu_custom_call.1} parent=1 // pred_check_branch
      %356 = sbr.rel (0) target = $region45
    $region44: #{tpu_custom_call.1} parent=1 // pred_region
      %358 = vsyncadd [#allocation3], 0
      %s359 = sshll.u32 [#allocation2], 4
      %s360 = int_to_ptr.vmem [resolvable:$true] %s359
      %s361 = sshll.u32 %s10, 4
      %s362 = int_to_ptr.hbm [resolvable:$true] %s361
      %367 = dma.vmem_to_hbm [thread:$0]  %s360, 256, %s362, [#allocation3], 128, 128, 8
    $region45: #{tpu_custom_call.1} parent=1 // pred_fallthru
      _
    // Predicated region
    $region46: #{tpu_custom_call.1} parent=1 // pred_check
      _
    $region47: #{tpu_custom_call.1} parent=1 // pred_check_branch
      %369 = sbr.rel (0) target = $region49
    $region48: #{tpu_custom_call.1} parent=1 // pred_region
      _
    $region49: #{tpu_custom_call.1} parent=1 // pred_fallthru
      _
    // Predicated region
    $region50: #{tpu_custom_call.1} parent=1 // pred_check
      _
    $region51: #{tpu_custom_call.1} parent=1 // pred_check_branch
      %371 = sbr.rel (0) target = $region53
    $region52: #{tpu_custom_call.1} parent=1 // pred_region
      %373 = dma.done [#allocation3], 256
    $region53: #{tpu_custom_call.1} parent=1 // pred_fallthru
      _
    %374 = vsyncpa [#allocation3], 1

</llo_original>
